<compile_context>
chip_gen: v7x
topology: tpu7x:2x2x1
jax: 0.10.0
libtpu: 0.0.40
codegen_flags: <defaults>
</compile_context>

<pallas_src>
import math

import jax
import jax.numpy as jnp
from jax.experimental import pallas as pl
from jax.experimental.pallas import tpu as pltpu


def _round_down(x: int, m: int) -> int:
    return (x // m) * m


def _layerscale_kernel(x_ref, g_ref, o_ref):
    # x_ref: (block_rows, block_cols) VMEM tile; g_ref: (1, block_cols) (resident).
    o_ref[...] = x_ref[...] * g_ref[...]


def layer_scale(
    x: jax.Array,
    gamma: jax.Array,
    *,
    min_kernel_bytes: int = 1 << 20,      # below this, XLA's fused elementwise wins
    target_block_bytes: int = 6 << 20,    # per-buffer VMEM target (~24 MiB total w/ dbl-buf)
) -> jax.Array:
    """x: (..., D), gamma: (D,). Returns x * gamma (broadcast over the last dim)."""
    orig_shape = x.shape
    D = orig_shape[-1]
    assert gamma.shape == (D,)
    gamma = gamma.astype(x.dtype)

    itemsize = x.dtype.itemsize
    N = x.size
    if N == 0 or N * itemsize < min_kernel_bytes:
        # Kernel launch + DMA setup dominates for KiB-scale inputs.
        return x * gamma

    # ---- Choose a lane-dense 2-D view (rows, width) of the flat buffer ----------
    if D % 128 == 0:
        width = D
        x2 = x.reshape(-1, D)
        g_row = gamma.reshape(1, D)
    else:
        W = (D * 128) // math.gcd(D, 128)  # lcm(D, 128)
        if N % W == 0:
            # Grow W (stays a multiple of 128 and a multiple of D) while it divides N.
            while (W * 2) <= 4096 and N % (W * 2) == 0:
                W *= 2
            width = W
            x2 = x.reshape(-1, width)
            g_row = jnp.tile(gamma, width // D).reshape(1, width)  # periodic broadcast
        else:
            # Lossless repack not possible; fall back to (rows, D). Correct but uses
            # masked stores when D < 128.
            width = D
            x2 = x.reshape(-1, D)
            g_row = gamma.reshape(1, D)

    R = x2.shape[0]

    # ---- Column blocking only for very wide rows (keeps row blocks large) -------
    if width % 128 == 0 and width > 8192:
        block_cols = 2048
    else:
        block_cols = width

    # ---- Row blocking sized to the VMEM budget -----------------------------------
    rows_target = target_block_bytes // max(1, block_cols * itemsize)
    block_rows = max(8, min(1024, _round_down(int(rows_target), 8)))
    if R <= block_rows:
        block_rows = R  # single full row block (legal: equals the array dim)

    grid = (pl.cdiv(R, block_rows), pl.cdiv(width, block_cols))

    block_bytes = block_rows * block_cols * itemsize
    # 2 buffers each for input and output blocks + gamma row + slack.
    vmem_needed = 2 * 2 * block_bytes + 2 * block_cols * itemsize + (2 << 20)
    vmem_limit = int(min(max(vmem_needed, 16 << 20), 64 << 20))

    cost = pl.CostEstimate(
        flops=N,
        transcendentals=0,
        bytes_accessed=2 * N * itemsize + D * itemsize,
    )

    out = pl.pallas_call(
        _layerscale_kernel,
        out_shape=jax.ShapeDtypeStruct((R, width), x.dtype),
        grid_spec=pltpu.PrefetchScalarGridSpec(
            num_scalar_prefetch=0,
            grid=grid,
            in_specs=[
                pl.BlockSpec((block_rows, block_cols), lambda i, j: (i, j)),
                pl.BlockSpec((1, block_cols), lambda i, j: (0, j)),
            ],
            out_specs=pl.BlockSpec((block_rows, block_cols), lambda i, j: (i, j)),
        ),
        compiler_params=pltpu.CompilerParams(
            dimension_semantics=("parallel", "parallel"),
            vmem_limit_bytes=vmem_limit,
        ),
        cost_estimate=cost,
    )(x2, g_row)

    return out.reshape(orig_shape)


if __name__ == "__main__":
    key = jax.random.PRNGKey(0)
    B, S, D = 2, 8, 32  # small shapes consistent with the module: batch=2, seq=8, hidden=32
    init_values = 0.1

    x = jax.random.normal(key, (B, S, D), dtype=jnp.float32)
    # Matches nn.Parameter(init_values * torch.ones(dim))
    gamma = init_values * jnp.ones((D,), dtype=jnp.float32)

    # Force the Pallas kernel path even at this tiny size so the kernel is exercised.
    y = layer_scale(x, gamma, min_kernel_bytes=0)
    y = jax.block_until_ready(y)

    ref = x * gamma
    assert y.shape == x.shape
    assert jnp.allclose(y, ref, atol=1e-6, rtol=1e-6), "mismatch vs reference (kernel path)"

    # Also verify the small-input fast path (dispatcher) matches the reference.
    y2 = jax.block_until_ready(layer_scale(x, gamma))
    assert jnp.allclose(y2, ref, atol=1e-6, rtol=1e-6), "mismatch vs reference (fast path)"

    print("KERNEL_OK")
</pallas_src>

<mosaic_0001>
module attributes {stable_mosaic.version = 11 : i64} {
  func.func @_layerscale_kernel(%arg0: i32, %arg1: i32, %arg2: memref<1x512xf32, #tpu.memory_space<vmem>>, %arg3: memref<1x512xf32, #tpu.memory_space<vmem>>, %arg4: memref<1x512xf32, #tpu.memory_space<vmem>>) attributes {dimension_semantics = [#tpu.dimension_semantics<parallel>, #tpu.dimension_semantics<parallel>], iteration_bounds = array<i64: 1, 1>, scalar_prefetch = 0 : i64, scratch_operands = 0 : i64, tpu.core_type = #tpu.core_type<tc>, window_params = [{transform_indices = @transform_0, window_bounds = array<i64: 1, 512>}, {transform_indices = @transform_1, window_bounds = array<i64: 1, 512>}, {transform_indices = @transform_2, window_bounds = array<i64: 1, 512>}]} {
    %c0 = arith.constant 0 : index
    %c0_0 = arith.constant 0 : index
    %0 = vector.load %arg2[%c0, %c0_0] : memref<1x512xf32, #tpu.memory_space<vmem>>, vector<1x512xf32>
    %c0_1 = arith.constant 0 : index
    %c0_2 = arith.constant 0 : index
    %1 = vector.load %arg3[%c0_1, %c0_2] : memref<1x512xf32, #tpu.memory_space<vmem>>, vector<1x512xf32>
    %2 = arith.mulf %0, %1 : vector<1x512xf32>
    %c0_3 = arith.constant 0 : index
    %c0_4 = arith.constant 0 : index
    %3 = vector.load %arg4[%c0_3, %c0_4] : memref<1x512xf32, #tpu.memory_space<vmem>>, vector<1x512xf32>
    tpu.vector_store %arg4[%c0_3, %c0_4], %2 {strides = array<i32>} : memref<1x512xf32, #tpu.memory_space<vmem>>, vector<1x512xf32>,
    return
  }
  func.func @transform_0(%arg0: i32, %arg1: i32) -> (i32, i32) {
    %c0_i32 = arith.constant 0 : i32
    return %arg0, %arg1 : i32, i32
  }
  func.func @transform_1(%arg0: i32, %arg1: i32) -> (i32, i32) {
    %c0_i32 = arith.constant 0 : i32
    %c0_i32_0 = arith.constant 0 : i32
    return %c0_i32, %arg1 : i32, i32
  }
  func.func @transform_2(%arg0: i32, %arg1: i32) -> (i32, i32) {
    %c0_i32 = arith.constant 0 : i32
    return %arg0, %arg1 : i32, i32
  }
}

</mosaic_0001>

<llo_original>
// kernel: tpu_custom_call.1
$region0: #{tpu_custom_call.1}
  #allocation0 [shape = 'u32[]', space=smem, size = 0x4, offset = 0x4, fixed_abs, tag = 'smem constant byte address 0x4 - core index']
  #allocation1 [shape = 'u32[144,128]{1,0:T(1,128)}', space=vmem, size = 0x12000, scoped, tag = 'internal scratch']
  %s0 = inlined_call_operand.hbm [shape: f32[1,512], index: 0, kind: input, shape index: {}]
  %s1 = inlined_call_operand.hbm [shape: f32[1,512], index: 1, kind: input, shape index: {}]
  %s2 = inlined_call_operand.hbm [shape: f32[1,512], index: 2, kind: output, shape index: {}]
  %s3 = sld [smem:[#allocation0]]
  $region26: #{tpu_custom_call.1} parent=0
    _
  %s5 = ssub.s32 1, %s3
  %s6 = scalar_select 0, %s5, %s3
  $region1: #{tpu_custom_call.1} parent=0
    #allocation2 [shape = 'u8[2048]{0}', space=vmem, size = 0x800, scoped, tag = 'input window, operand 0, single buffered']
    #allocation3 [shape = 's32[1]{0}', space=sflag, size = 0x4, scoped, tag = 'scoped memory for tpu_custom_call.1']
    #allocation4 [shape = 's32[1]{0}', space=sflag, size = 0x4, scoped, tag = 'scoped memory for tpu_custom_call.1']
    #allocation5 [shape = 'u8[2048]{0}', space=vmem, size = 0x800, scoped, tag = 'input window, operand 1, single buffered']
    #allocation6 [shape = 's32[1]{0}', space=sflag, size = 0x4, scoped, tag = 'scoped memory for tpu_custom_call.1']
    #allocation7 [shape = 'u8[2048]{0}', space=vmem, size = 0x800, scoped, tag = 'output window, operand 0, single buffered']
    %7 = vsyncpa [#allocation3], 0
    %8 = vsyncpa [#allocation6], 0
    %9 = vsyncpa [#allocation4], 0
    // Predicated region
    $region2: #{tpu_custom_call.1} parent=1 // pred_check
      _
    $region3: #{tpu_custom_call.1} parent=1 // pred_check_branch
      %11 = sbr.rel (0) target = $region5
    $region4: #{tpu_custom_call.1} parent=1 // pred_region
      %s13 = ssub.s32 64, 64
      %14 = vsyncadd [#allocation3], %s13
      %s16 = sshll.u32 [#allocation2], 4
      %s17 = int_to_ptr.vmem [resolvable:$true] %s16
      %19 = dma.hbm_to_vmem [thread:$0]  %s0, 64, %s17, [#allocation3]
    $region5: #{tpu_custom_call.1} parent=1 // pred_fallthru
      _
    // Predicated region
    $region6: #{tpu_custom_call.1} parent=1 // pred_check
      _
    $region7: #{tpu_custom_call.1} parent=1 // pred_check_branch
      %21 = sbr.rel (0) target = $region9
    $region8: #{tpu_custom_call.1} parent=1 // pred_region
      %s23 = ssub.s32 64, 64
      %24 = vsyncadd [#allocation6], %s23
      %s26 = sshll.u32 [#allocation5], 4
      %s27 = int_to_ptr.vmem [resolvable:$true] %s26
      %29 = dma.hbm_to_vmem [thread:$0]  %s1, 64, %s27, [#allocation6]
    $region9: #{tpu_custom_call.1} parent=1 // pred_fallthru
      _
    // Predicated region
    $region10: #{tpu_custom_call.1} parent=1 // pred_check
      _
    $region11: #{tpu_custom_call.1} parent=1 // pred_check_branch
      %31 = sbr.rel (0) target = $region13
    $region12: #{tpu_custom_call.1} parent=1 // pred_region
      %32 = dma.done [#allocation3], 64
    $region13: #{tpu_custom_call.1} parent=1 // pred_fallthru
      _
    // Predicated region
    $region14: #{tpu_custom_call.1} parent=1 // pred_check
      _
    $region15: #{tpu_custom_call.1} parent=1 // pred_check_branch
      %34 = sbr.rel (0) target = $region17
    $region16: #{tpu_custom_call.1} parent=1 // pred_region
      %35 = dma.done [#allocation6], 64
    $region17: #{tpu_custom_call.1} parent=1 // pred_fallthru
      _
    %v36 = vld [vmem:[#allocation2] sm:$0xf]
    %v37 = vld [vmem:[#allocation5] sm:$0xf]
    %v38 = vmul.f32 %v36, %v37
    %v39 = vlaneseq
    %vm40 = vcmp.ge.s32.totalorder %v39, 0
    %vm41 = vcmp.lt.s32.totalorder %v39, 512
    %vm42 = vmand %vm40, %vm41
    %43 = vst.msk [vmem:[#allocation7] sm:$0xf] %vm42, %v38
    // Predicated region
    $region18: #{tpu_custom_call.1} parent=1 // pred_check
      _
    $region19: #{tpu_custom_call.1} parent=1 // pred_check_branch
      %45 = sbr.rel (0) target = $region21
    $region20: #{tpu_custom_call.1} parent=1 // pred_region
      %s47 = ssub.s32 64, 64
      %48 = vsyncadd [#allocation4], %s47
      %s50 = sshll.u32 [#allocation7], 4
      %s51 = int_to_ptr.vmem [resolvable:$true] %s50
      %53 = dma.vmem_to_hbm [thread:$0]  %s51, 64, %s2, [#allocation4]
    $region21: #{tpu_custom_call.1} parent=1 // pred_fallthru
      _
    // Predicated region
    $region22: #{tpu_custom_call.1} parent=1 // pred_check
      _
    $region23: #{tpu_custom_call.1} parent=1 // pred_check_branch
      %55 = sbr.rel (0) target = $region25
    $region24: #{tpu_custom_call.1} parent=1 // pred_region
      %56 = dma.done [#allocation4], 64
    $region25: #{tpu_custom_call.1} parent=1 // pred_fallthru
      _
    %57 = vsyncpa [#allocation3], 1
    %58 = vsyncpa [#allocation6], 1
    %59 = vsyncpa [#allocation4], 1

</llo_original>
